<compile_context>
chip_gen: v5e
topology: v5e:2x2
jax: 0.10.0
libtpu: 0.0.40
codegen_flags: <defaults>
</compile_context>

<pallas_src>
import math
import jax
import jax.numpy as jnp
from jax.experimental import pallas as pl
from jax.experimental.pallas import tpu as pltpu

INPUT_SIZE = 20
HIDDEN1 = 128
HIDDEN2 = 64
NUM_ACTIONS = 3

_LANES = 128
_DEFAULT_BLOCK_B = 4096   # batch tile cap; ~16 MiB VMEM working set -> fits every gen
_MIN_GRID_STEPS = 2       # aim for >=2 steps so v7x's 2 TCs both get work


def _round_up(n: int, m: int) -> int:
    return ((n + m - 1) // m) * m


def _choose_batch_tile(batch: int, block_b: int) -> int:
    """Lane-aligned batch tile: big enough to amortize per-step overhead,
    capped by VMEM budget, and small enough that (when possible) the grid has
    at least _MIN_GRID_STEPS steps for megacore sharding."""
    tb = _round_up(max(1, -(-batch // _MIN_GRID_STEPS)), _LANES)
    return max(_LANES, min(block_b, tb))


def _strategy_kernel(x_ref, w1_ref, b1_ref, w2_ref, b2_ref, w3_ref, b3_ref, out_ref):
    # x_ref : (TB, IN) f32          w*_ref : (in, out) bf16, VMEM-resident
    # b*_ref: (1, out) f32          out_ref: (TB, NUM_ACTIONS) f32
    xb = x_ref[...].astype(jnp.bfloat16)                                   # (TB, IN)

    h1 = jnp.dot(xb, w1_ref[...], preferred_element_type=jnp.float32)      # (TB, H1)
    h1 = jnp.maximum(h1 + b1_ref[...], 0.0)

    h2 = jnp.dot(h1.astype(jnp.bfloat16), w2_ref[...],
                 preferred_element_type=jnp.float32)                       # (TB, H2)
    h2 = jnp.maximum(h2 + b2_ref[...], 0.0)

    logits = jnp.dot(h2.astype(jnp.bfloat16), w3_ref[...],
                     preferred_element_type=jnp.float32)                   # (TB, A)
    logits = logits + b3_ref[...]

    # Numerically-stable softmax over the (tiny) action axis; exact divide so
    # rows sum to 1 to f32 rounding.
    m = jnp.max(logits, axis=-1, keepdims=True)                            # (TB, 1)
    e = jnp.exp(logits - m)
    denom = jnp.sum(e, axis=-1, keepdims=True)                             # (TB, 1)
    out_ref[...] = e / denom


def prepare_params(params):
    """One-time conversion of PyTorch-layout params to kernel layout:
    weights transposed to (in, out) and cast to bf16; biases f32, shape (1, out)."""
    return {
        "w1t": jnp.asarray(params["w1"]).T.astype(jnp.bfloat16),
        "b1": jnp.asarray(params["b1"], jnp.float32).reshape(1, -1),
        "w2t": jnp.asarray(params["w2"]).T.astype(jnp.bfloat16),
        "b2": jnp.asarray(params["b2"], jnp.float32).reshape(1, -1),
        "w3t": jnp.asarray(params["w3"]).T.astype(jnp.bfloat16),
        "b3": jnp.asarray(params["b3"], jnp.float32).reshape(1, -1),
    }


def strategy_network_forward(x, prepared, *, block_b=_DEFAULT_BLOCK_B):
    """x: (B, INPUT_SIZE) float32. Returns softmax probabilities (B, NUM_ACTIONS)."""
    w1t, b1 = prepared["w1t"], prepared["b1"]
    w2t, b2 = prepared["w2t"], prepared["b2"]
    w3t, b3 = prepared["w3t"], prepared["b3"]

    B = x.shape[0]
    tb = _choose_batch_tile(B, block_b)
    b_pad = _round_up(B, tb)
    if b_pad != B:
        x = jnp.pad(x, ((0, b_pad - B), (0, 0)))
    grid = (b_pad // tb,)

    def resident(a):  # whole array, VMEM-resident across the batch grid
        return pl.BlockSpec(a.shape, lambda i: (0, 0))

    out = pl.pallas_call(
        _strategy_kernel,
        out_shape=jax.ShapeDtypeStruct((b_pad, NUM_ACTIONS), jnp.float32),
        grid=grid,
        in_specs=[
            pl.BlockSpec((tb, INPUT_SIZE), lambda i: (i, 0)),   # streamed x tiles
            resident(w1t), resident(b1),
            resident(w2t), resident(b2),
            resident(w3t), resident(b3),
        ],
        out_specs=pl.BlockSpec((tb, NUM_ACTIONS), lambda i: (i, 0)),
        compiler_params=pltpu.CompilerParams(
            dimension_semantics=("parallel",),
            vmem_limit_bytes=32 * 1024 * 1024),
    )(x, w1t, b1, w2t, b2, w3t, b3)

    return out[:B] if b_pad != B else out


def init_params(key):
    """PyTorch nn.Linear-style init; weights stored (out_features, in_features)."""
    ks = jax.random.split(key, 6)

    def linear(kw, kb, fan_in, fan_out):
        bound = 1.0 / math.sqrt(fan_in)
        w = jax.random.uniform(kw, (fan_out, fan_in), jnp.float32, -bound, bound)
        b = jax.random.uniform(kb, (fan_out,), jnp.float32, -bound, bound)
        return w, b

    w1, b1 = linear(ks[0], ks[1], INPUT_SIZE, HIDDEN1)
    w2, b2 = linear(ks[2], ks[3], HIDDEN1, HIDDEN2)
    w3, b3 = linear(ks[4], ks[5], HIDDEN2, NUM_ACTIONS)
    return {"w1": w1, "b1": b1, "w2": w2, "b2": b2, "w3": w3, "b3": b3}


def _reference_forward(x, p, matmul_dtype=jnp.float32):
    c = lambda a: a.astype(matmul_dtype)
    h1 = jnp.maximum(
        jnp.dot(c(x), c(p["w1"]).T, preferred_element_type=jnp.float32) + p["b1"], 0.0)
    h2 = jnp.maximum(
        jnp.dot(c(h1), c(p["w2"]).T, preferred_element_type=jnp.float32) + p["b2"], 0.0)
    logits = jnp.dot(c(h2), c(p["w3"]).T, preferred_element_type=jnp.float32) + p["b3"]
    return jax.nn.softmax(logits, axis=-1)


if __name__ == "__main__":
    key = jax.random.PRNGKey(0)
    kx, kp = jax.random.split(key)

    batch = 8
    x = jax.random.normal(kx, (batch, INPUT_SIZE), dtype=jnp.float32)
    params = init_params(kp)
    prepared = prepare_params(params)   # one-time bf16 / transpose conversion

    fwd = jax.jit(strategy_network_forward)
    out = jax.block_until_ready(fwd(x, prepared))

    ref_bf16 = _reference_forward(x, params, jnp.bfloat16)  # matched matmul precision
    ref_f32 = _reference_forward(x, params, jnp.float32)    # full-precision sanity check

    assert out.shape == (batch, NUM_ACTIONS)
    assert bool(jnp.allclose(jnp.sum(out, axis=-1), 1.0, atol=1e-4))
    assert bool(jnp.allclose(out, ref_bf16, atol=2e-3, rtol=2e-3))
    assert bool(jnp.allclose(out, ref_f32, atol=5e-2, rtol=5e-2))

    print("KERNEL_OK")
</pallas_src>

<mosaic_0001>
module attributes {stable_mosaic.version = 11 : i64} {
  func.func @_strategy_kernel(%arg0: i32, %arg1: memref<128x20xf32, #tpu.memory_space<vmem>>, %arg2: memref<20x128xbf16, #tpu.memory_space<vmem>>, %arg3: memref<1x128xf32, #tpu.memory_space<vmem>>, %arg4: memref<128x64xbf16, #tpu.memory_space<vmem>>, %arg5: memref<1x64xf32, #tpu.memory_space<vmem>>, %arg6: memref<64x3xbf16, #tpu.memory_space<vmem>>, %arg7: memref<1x3xf32, #tpu.memory_space<vmem>>, %arg8: memref<128x3xf32, #tpu.memory_space<vmem>>) attributes {dimension_semantics = [#tpu.dimension_semantics<parallel>], iteration_bounds = array<i64: 1>, scalar_prefetch = 0 : i64, scratch_operands = 0 : i64, tpu.core_type = #tpu.core_type<tc>, window_params = [{transform_indices = @transform_0, window_bounds = array<i64: 128, 20>}, {pipeline_mode = #tpu.pipeline_mode<synchronous>, transform_indices = @transform_1, window_bounds = array<i64: 20, 128>}, {pipeline_mode = #tpu.pipeline_mode<synchronous>, transform_indices = @transform_2, window_bounds = array<i64: 1, 128>}, {pipeline_mode = #tpu.pipeline_mode<synchronous>, transform_indices = @transform_3, window_bounds = array<i64: 128, 64>}, {pipeline_mode = #tpu.pipeline_mode<synchronous>, transform_indices = @transform_4, window_bounds = array<i64: 1, 64>}, {pipeline_mode = #tpu.pipeline_mode<synchronous>, transform_indices = @transform_5, window_bounds = array<i64: 64, 3>}, {pipeline_mode = #tpu.pipeline_mode<synchronous>, transform_indices = @transform_6, window_bounds = array<i64: 1, 3>}, {transform_indices = @transform_7, window_bounds = array<i64: 128, 3>}]} {
    %c0 = arith.constant 0 : index
    %c0_0 = arith.constant 0 : index
    %0 = vector.load %arg1[%c0, %c0_0] : memref<128x20xf32, #tpu.memory_space<vmem>>, vector<128x20xf32>
    %1 = arith.truncf %0 : vector<128x20xf32> to vector<128x20xbf16>
    %c0_1 = arith.constant 0 : index
    %c0_2 = arith.constant 0 : index
    %2 = vector.load %arg2[%c0_1, %c0_2] : memref<20x128xbf16, #tpu.memory_space<vmem>>, vector<20x128xbf16>
    %cst = arith.constant dense<0.000000e+00> : vector<128x128xf32>
    %3 = tpu.matmul %1, %2, %cst {dimension_numbers = #tpu.dot_dimension_numbers<[1], [0], [0], [1], [0, 0, 1, 1], [], []>} : vector<128x20xbf16>, vector<20x128xbf16>, vector<128x128xf32> -> vector<128x128xf32>
    %c0_3 = arith.constant 0 : index
    %c0_4 = arith.constant 0 : index
    %4 = vector.load %arg3[%c0_3, %c0_4] : memref<1x128xf32, #tpu.memory_space<vmem>>, vector<1x128xf32>
    %5 = vector.broadcast %4 : vector<1x128xf32> to vector<128x128xf32>
    %6 = arith.addf %3, %5 : vector<128x128xf32>
    %cst_5 = arith.constant 0.000000e+00 : f32
    %7 = vector.broadcast %cst_5 : f32 to vector<128x128xf32>
    %8 = arith.maximumf %6, %7 : vector<128x128xf32>
    %9 = arith.truncf %8 : vector<128x128xf32> to vector<128x128xbf16>
    %c0_6 = arith.constant 0 : index
    %c0_7 = arith.constant 0 : index
    %10 = vector.load %arg4[%c0_6, %c0_7] : memref<128x64xbf16, #tpu.memory_space<vmem>>, vector<128x64xbf16>
    %cst_8 = arith.constant dense<0.000000e+00> : vector<128x64xf32>
    %11 = tpu.matmul %9, %10, %cst_8 {dimension_numbers = #tpu.dot_dimension_numbers<[1], [0], [0], [1], [0, 0, 1, 1], [], []>} : vector<128x128xbf16>, vector<128x64xbf16>, vector<128x64xf32> -> vector<128x64xf32>
    %c0_9 = arith.constant 0 : index
    %c0_10 = arith.constant 0 : index
    %12 = vector.load %arg5[%c0_9, %c0_10] : memref<1x64xf32, #tpu.memory_space<vmem>>, vector<1x64xf32>
    %13 = vector.broadcast %12 : vector<1x64xf32> to vector<128x64xf32>
    %14 = arith.addf %11, %13 : vector<128x64xf32>
    %cst_11 = arith.constant 0.000000e+00 : f32
    %15 = vector.broadcast %cst_11 : f32 to vector<128x64xf32>
    %16 = arith.maximumf %14, %15 : vector<128x64xf32>
    %17 = arith.truncf %16 : vector<128x64xf32> to vector<128x64xbf16>
    %c0_12 = arith.constant 0 : index
    %c0_13 = arith.constant 0 : index
    %18 = vector.load %arg6[%c0_12, %c0_13] : memref<64x3xbf16, #tpu.memory_space<vmem>>, vector<64x3xbf16>
    %cst_14 = arith.constant dense<0.000000e+00> : vector<128x3xf32>
    %19 = tpu.matmul %17, %18, %cst_14 {dimension_numbers = #tpu.dot_dimension_numbers<[1], [0], [0], [1], [0, 0, 1, 1], [], []>} : vector<128x64xbf16>, vector<64x3xbf16>, vector<128x3xf32> -> vector<128x3xf32>
    %c0_15 = arith.constant 0 : index
    %c0_16 = arith.constant 0 : index
    %20 = vector.load %arg7[%c0_15, %c0_16] : memref<1x3xf32, #tpu.memory_space<vmem>>, vector<1x3xf32>
    %21 = vector.broadcast %20 : vector<1x3xf32> to vector<128x3xf32>
    %22 = arith.addf %19, %21 : vector<128x3xf32>
    %cst_17 = arith.constant dense<0xFF800000> : vector<128xf32>
    %23 = vector.multi_reduction <maximumf>, %22, %cst_17 [1] : vector<128x3xf32> to vector<128xf32>
    %24 = vector.shape_cast %23 : vector<128xf32> to vector<128x1xf32>
    %25 = vector.broadcast %24 : vector<128x1xf32> to vector<128x3xf32>
    %26 = arith.subf %22, %25 : vector<128x3xf32>
    %27 = math.exp %26 : vector<128x3xf32>
    %cst_18 = arith.constant dense<0.000000e+00> : vector<128xf32>
    %28 = vector.multi_reduction <add>, %27, %cst_18 [1] : vector<128x3xf32> to vector<128xf32>
    %29 = vector.shape_cast %28 : vector<128xf32> to vector<128x1xf32>
    %30 = vector.broadcast %29 : vector<128x1xf32> to vector<128x3xf32>
    %31 = arith.divf %27, %30 : vector<128x3xf32>
    %c0_19 = arith.constant 0 : index
    %c0_20 = arith.constant 0 : index
    %32 = vector.load %arg8[%c0_19, %c0_20] : memref<128x3xf32, #tpu.memory_space<vmem>>, vector<128x3xf32>
    tpu.vector_store %arg8[%c0_19, %c0_20], %31 {strides = array<i32>} : memref<128x3xf32, #tpu.memory_space<vmem>>, vector<128x3xf32>,
    return
  }
  func.func @transform_0(%arg0: i32) -> (i32, i32) {
    %c0_i32 = arith.constant 0 : i32
    %c0_i32_0 = arith.constant 0 : i32
    return %arg0, %c0_i32 : i32, i32
  }
  func.func @transform_1(%arg0: i32) -> (i32, i32) {
    %c0_i32 = arith.constant 0 : i32
    %c0_i32_0 = arith.constant 0 : i32
    %c0_i32_1 = arith.constant 0 : i32
    return %c0_i32, %c0_i32_0 : i32, i32
  }
  func.func @transform_2(%arg0: i32) -> (i32, i32) {
    %c0_i32 = arith.constant 0 : i32
    %c0_i32_0 = arith.constant 0 : i32
    %c0_i32_1 = arith.constant 0 : i32
    return %c0_i32, %c0_i32_0 : i32, i32
  }
  func.func @transform_3(%arg0: i32) -> (i32, i32) {
    %c0_i32 = arith.constant 0 : i32
    %c0_i32_0 = arith.constant 0 : i32
    %c0_i32_1 = arith.constant 0 : i32
    return %c0_i32, %c0_i32_0 : i32, i32
  }
  func.func @transform_4(%arg0: i32) -> (i32, i32) {
    %c0_i32 = arith.constant 0 : i32
    %c0_i32_0 = arith.constant 0 : i32
    %c0_i32_1 = arith.constant 0 : i32
    return %c0_i32, %c0_i32_0 : i32, i32
  }
  func.func @transform_5(%arg0: i32) -> (i32, i32) {
    %c0_i32 = arith.constant 0 : i32
    %c0_i32_0 = arith.constant 0 : i32
    %c0_i32_1 = arith.constant 0 : i32
    return %c0_i32, %c0_i32_0 : i32, i32
  }
  func.func @transform_6(%arg0: i32) -> (i32, i32) {
    %c0_i32 = arith.constant 0 : i32
    %c0_i32_0 = arith.constant 0 : i32
    %c0_i32_1 = arith.constant 0 : i32
    return %c0_i32, %c0_i32_0 : i32, i32
  }
  func.func @transform_7(%arg0: i32) -> (i32, i32) {
    %c0_i32 = arith.constant 0 : i32
    %c0_i32_0 = arith.constant 0 : i32
    return %arg0, %c0_i32 : i32, i32
  }
}

</mosaic_0001>

<llo_original>
// kernel: strategy_network_forward.1
$region0: #{strategy_network_forward.1}
  #allocation0 [shape = 'u32[]', space=smem, size = 0x4, offset = 0x4, fixed_abs, tag = 'smem constant byte address 0x4 - core index']
  #allocation1 [shape = 'u32[72,128]{1,0:T(1,128)}', space=vmem, size = 0x9000, scoped, tag = 'internal scratch']
  %s0 = inlined_call_operand.vmem [shape: f32[128,20], index: 0, kind: input, shape index: {}]
  %s1 = inlined_call_operand.vmem [shape: bf16[20,128], index: 1, kind: input, shape index: {}]
  %s2 = inlined_call_operand.vmem [shape: f32[1,128], index: 2, kind: input, shape index: {}]
  %s3 = inlined_call_operand.vmem [shape: bf16[128,64], index: 3, kind: input, shape index: {}]
  %s4 = inlined_call_operand.vmem [shape: f32[1,64], index: 4, kind: input, shape index: {}]
  %s5 = inlined_call_operand.vmem [shape: bf16[64,3], index: 5, kind: input, shape index: {}]
  %s6 = inlined_call_operand.vmem [shape: f32[1,3], index: 6, kind: input, shape index: {}]
  %s7 = inlined_call_operand.vmem [shape: f32[128,3], index: 7, kind: output, shape index: {}]
  %s8 = sld [smem:[#allocation0]]
  $region38: #{strategy_network_forward.1} parent=0
    _
  %s10 = ssub.s32 1, %s8
  %s11 = scalar_select 0, %s10, %s8
  // Predicated region
  $region2: #{strategy_network_forward.1} parent=0 // pred_check
    _
  $region3: #{strategy_network_forward.1} parent=0 // pred_check_branch
    %13 = sbr.rel (0) target = $region5
  $region4: #{strategy_network_forward.1} parent=0 // pred_region
    _
  $region5: #{strategy_network_forward.1} parent=0 // pred_fallthru
    _
  // Predicated region
  $region6: #{strategy_network_forward.1} parent=0 // pred_check
    _
  $region7: #{strategy_network_forward.1} parent=0 // pred_check_branch
    %15 = sbr.rel (0) target = $region9
  $region8: #{strategy_network_forward.1} parent=0 // pred_region
    _
  $region9: #{strategy_network_forward.1} parent=0 // pred_fallthru
    _
  // Predicated region
  $region10: #{strategy_network_forward.1} parent=0 // pred_check
    _
  $region11: #{strategy_network_forward.1} parent=0 // pred_check_branch
    %17 = sbr.rel (0) target = $region13
  $region12: #{strategy_network_forward.1} parent=0 // pred_region
    _
  $region13: #{strategy_network_forward.1} parent=0 // pred_fallthru
    _
  // Predicated region
  $region14: #{strategy_network_forward.1} parent=0 // pred_check
    _
  $region15: #{strategy_network_forward.1} parent=0 // pred_check_branch
    %19 = sbr.rel (0) target = $region17
  $region16: #{strategy_network_forward.1} parent=0 // pred_region
    _
  $region17: #{strategy_network_forward.1} parent=0 // pred_fallthru
    _
  // Predicated region
  $region18: #{strategy_network_forward.1} parent=0 // pred_check
    _
  $region19: #{strategy_network_forward.1} parent=0 // pred_check_branch
    %21 = sbr.rel (0) target = $region21
  $region20: #{strategy_network_forward.1} parent=0 // pred_region
    _
  $region21: #{strategy_network_forward.1} parent=0 // pred_fallthru
    _
  // Predicated region
  $region22: #{strategy_network_forward.1} parent=0 // pred_check
    _
  $region23: #{strategy_network_forward.1} parent=0 // pred_check_branch
    %23 = sbr.rel (0) target = $region25
  $region24: #{strategy_network_forward.1} parent=0 // pred_region
    _
  $region25: #{strategy_network_forward.1} parent=0 // pred_fallthru
    _
  // Predicated region
  $region26: #{strategy_network_forward.1} parent=0 // pred_check
    _
  $region27: #{strategy_network_forward.1} parent=0 // pred_check_branch
    %25 = sbr.rel (0) target = $region29
  $region28: #{strategy_network_forward.1} parent=0 // pred_region
    _
  $region29: #{strategy_network_forward.1} parent=0 // pred_fallthru
    _
  %v27 = vld [vmem:[%s0] sm:$0xff]
  %v28 = vld [vmem:[%s0 + $0x8] sm:$0xff]
  %v29 = vld [vmem:[%s0 + $0x10] sm:$0xff]
  %v30 = vld [vmem:[%s0 + $0x18] sm:$0xff]
  %v31 = vld [vmem:[%s0 + $0x20] sm:$0xff]
  %v32 = vld [vmem:[%s0 + $0x28] sm:$0xff]
  %v33 = vld [vmem:[%s0 + $0x30] sm:$0xff]
  %v34 = vld [vmem:[%s0 + $0x38] sm:$0xff]
  %v35 = vld [vmem:[%s0 + $0x40] sm:$0xff]
  %v36 = vld [vmem:[%s0 + $0x48] sm:$0xff]
  %v37 = vld [vmem:[%s0 + $0x50] sm:$0xff]
  %v38 = vld [vmem:[%s0 + $0x58] sm:$0xff]
  %v39 = vld [vmem:[%s0 + $0x60] sm:$0xff]
  %v40 = vld [vmem:[%s0 + $0x68] sm:$0xff]
  %v41 = vld [vmem:[%s0 + $0x70] sm:$0xff]
  %v42 = vld [vmem:[%s0 + $0x78] sm:$0xff]
  %v43 = vpack.c.bf16 %v28, %v27
  %v44 = vpack.c.bf16 %v30, %v29
  %v45 = vpack.c.bf16 %v32, %v31
  %v46 = vpack.c.bf16 %v34, %v33
  %v47 = vpack.c.bf16 %v36, %v35
  %v48 = vpack.c.bf16 %v38, %v37
  %v49 = vpack.c.bf16 %v40, %v39
  %v50 = vpack.c.bf16 %v42, %v41
  %v51 = vld [vmem:[%s1] sm:$0xf]
  %v52 = vld [vmem:[%s1 + $0x4] sm:$0xf]
  %v53 = vld [vmem:[%s1 + $0x8] sm:$0x3]
  %v54 = vld [vmem:[%s2] sm:$0x1]
  %v56 = vperm.slane %v54, 0
  %v61 = vunpack.c.l.b16 %v51
  %v62 = vunpack.c.l.b16 %v52
  %v63 = vunpack.c.l.b16 %v53
  %v64 = vpack.c.b16 %v62, %v61
  %v65 = vpack.c.b16 %v63, %v63
  %vm67 = vcmask 162816
  %v69 = vsel %vm67, %v43, 0
  %v72 = vsel %vm67, %v44, 0
  %v75 = vsel %vm67, %v45, 0
  %v78 = vsel %vm67, %v46, 0
  %v81 = vsel %vm67, %v47, 0
  %v84 = vsel %vm67, %v48, 0
  %v87 = vsel %vm67, %v49, 0
  %v90 = vsel %vm67, %v50, 0
  %vm92 = vcmask 1041408
  %v94 = vsel %vm92, %v65, 0
  %96 = vmatpush.bf16.msra.mxu0 0
  %97 = vmatpush.bf16.msra.mxu0 0
  %98 = vmatpush.bf16.msra.mxu0 0
  %99 = vmatpush.bf16.msra.mxu0 0
  %100 = vmatpush.bf16.msra.mxu0 0
  %101 = vmatpush.bf16.msra.mxu0 0
  %102 = vmatpush.bf16.msra.mxu0 %v94
  %103 = vmatpush.bf16.msra.mxu0 %v64
  %104 = vmatmul.bf16.gmra.mxu0 %v69
  %v105 = vpop.f32.mrf.mxu0
  %v106 = vadd.f32 %v56, %v105
  %v107 = vpop.f32.mrf.mxu0
  %v108 = vadd.f32 %v56, %v107
  %109 = vmatmul.bf16.gmra.mxu0 %v72
  %v110 = vpop.f32.mrf.mxu0
  %v111 = vadd.f32 %v56, %v110
  %v112 = vpop.f32.mrf.mxu0
  %v113 = vadd.f32 %v56, %v112
  %114 = vmatmul.bf16.gmra.mxu0 %v75
  %v115 = vpop.f32.mrf.mxu0
  %v116 = vadd.f32 %v56, %v115
  %v117 = vpop.f32.mrf.mxu0
  %v118 = vadd.f32 %v56, %v117
  %119 = vmatmul.bf16.gmra.mxu0 %v78
  %v120 = vpop.f32.mrf.mxu0
  %v121 = vadd.f32 %v56, %v120
  %v122 = vpop.f32.mrf.mxu0
  %v123 = vadd.f32 %v56, %v122
  %124 = vmatmul.bf16.gmra.mxu0 %v81
  %v125 = vpop.f32.mrf.mxu0
  %v126 = vadd.f32 %v56, %v125
  %v127 = vpop.f32.mrf.mxu0
  %v128 = vadd.f32 %v56, %v127
  %129 = vmatmul.bf16.gmra.mxu0 %v84
  %v130 = vpop.f32.mrf.mxu0
  %v131 = vadd.f32 %v56, %v130
  %v132 = vpop.f32.mrf.mxu0
  %v133 = vadd.f32 %v56, %v132
  %134 = vmatmul.bf16.gmra.mxu0 %v87
  %v135 = vpop.f32.mrf.mxu0
  %v136 = vadd.f32 %v56, %v135
  %v137 = vpop.f32.mrf.mxu0
  %v138 = vadd.f32 %v56, %v137
  %139 = vmatmul.bf16.gmra.mxu0 %v90
  %v140 = vpop.f32.mrf.mxu0
  %v141 = vadd.f32 %v56, %v140
  %v142 = vpop.f32.mrf.mxu0
  %v143 = vadd.f32 %v56, %v142
  %144 = vdwg.mxu0
  %v145 = vmax.f32 %v106, 0.0
  %v146 = vmax.f32 %v108, 0.0
  %v147 = vmax.f32 %v111, 0.0
  %v148 = vmax.f32 %v113, 0.0
  %v149 = vmax.f32 %v116, 0.0
  %v150 = vmax.f32 %v118, 0.0
  %v151 = vmax.f32 %v121, 0.0
  %v152 = vmax.f32 %v123, 0.0
  %v153 = vmax.f32 %v126, 0.0
  %v154 = vmax.f32 %v128, 0.0
  %v155 = vmax.f32 %v131, 0.0
  %v156 = vmax.f32 %v133, 0.0
  %v157 = vmax.f32 %v136, 0.0
  %v158 = vmax.f32 %v138, 0.0
  %v159 = vmax.f32 %v141, 0.0
  %v160 = vmax.f32 %v143, 0.0
  %v161 = vpack.c.bf16 %v146, %v145
  %v162 = vpack.c.bf16 %v148, %v147
  %v163 = vpack.c.bf16 %v150, %v149
  %v164 = vpack.c.bf16 %v152, %v151
  %v165 = vpack.c.bf16 %v154, %v153
  %v166 = vpack.c.bf16 %v156, %v155
  %v167 = vpack.c.bf16 %v158, %v157
  %v168 = vpack.c.bf16 %v160, %v159
  %v169 = vld [vmem:[%s3] sm:$0xf]
  %v170 = vld [vmem:[%s3 + $0x4] sm:$0xf]
  %v171 = vld [vmem:[%s3 + $0x8] sm:$0xf]
  %v172 = vld [vmem:[%s3 + $0xc] sm:$0xf]
  %v173 = vld [vmem:[%s3 + $0x10] sm:$0xf]
  %v174 = vld [vmem:[%s3 + $0x14] sm:$0xf]
  %v175 = vld [vmem:[%s3 + $0x18] sm:$0xf]
  %v176 = vld [vmem:[%s3 + $0x1c] sm:$0xf]
  %v177 = vld [vmem:[%s3 + $0x20] sm:$0xf]
  %v178 = vld [vmem:[%s3 + $0x24] sm:$0xf]
  %v179 = vld [vmem:[%s3 + $0x28] sm:$0xf]
  %v180 = vld [vmem:[%s3 + $0x2c] sm:$0xf]
  %v181 = vld [vmem:[%s3 + $0x30] sm:$0xf]
  %v182 = vld [vmem:[%s3 + $0x34] sm:$0xf]
  %v183 = vld [vmem:[%s3 + $0x38] sm:$0xf]
  %v184 = vld [vmem:[%s3 + $0x3c] sm:$0xf]
  %v185 = vld [vmem:[%s4] sm:$0x1]
  %v187 = vperm.slane %v185, 0
  %v205 = vunpack.c.l.b16 %v169
  %v206 = vunpack.c.l.b16 %v170
  %v207 = vunpack.c.l.b16 %v171
  %v208 = vunpack.c.l.b16 %v172
  %v209 = vunpack.c.l.b16 %v173
  %v210 = vunpack.c.l.b16 %v174
  %v211 = vunpack.c.l.b16 %v175
  %v212 = vunpack.c.l.b16 %v176
  %v213 = vunpack.c.l.b16 %v177
  %v214 = vunpack.c.l.b16 %v178
  %v215 = vunpack.c.l.b16 %v179
  %v216 = vunpack.c.l.b16 %v180
  %v217 = vunpack.c.l.b16 %v181
  %v218 = vunpack.c.l.b16 %v182
  %v219 = vunpack.c.l.b16 %v183
  %v220 = vunpack.c.l.b16 %v184
  %v221 = vpack.c.b16 %v206, %v205
  %v222 = vpack.c.b16 %v208, %v207
  %v223 = vpack.c.b16 %v210, %v209
  %v224 = vpack.c.b16 %v212, %v211
  %v225 = vpack.c.b16 %v214, %v213
  %v226 = vpack.c.b16 %v216, %v215
  %v227 = vpack.c.b16 %v218, %v217
  %v228 = vpack.c.b16 %v220, %v219
  %237 = vmatpush.bf16.msra.mxu0 %v228
  %238 = vmatpush.bf16.msra.mxu0 %v227
  %239 = vmatpush.bf16.msra.mxu0 %v226
  %240 = vmatpush.bf16.msra.mxu0 %v225
  %241 = vmatpush.bf16.msra.mxu0 %v224
  %242 = vmatpush.bf16.msra.mxu0 %v223
  %243 = vmatpush.bf16.msra.mxu0 %v222
  %244 = vmatpush.bf16.msra.mxu0 %v221
  %245 = vmatmul.bf16.gmra.mxu0 %v161
  %v246 = vpop.f32.mrf.mxu0
  %v247 = vadd.f32 %v187, %v246
  %v248 = vpop.f32.mrf.mxu0
  %v249 = vadd.f32 %v187, %v248
  %250 = vmatmul.bf16.gmra.mxu0 %v162
  %v251 = vpop.f32.mrf.mxu0
  %v252 = vadd.f32 %v187, %v251
  %v253 = vpop.f32.mrf.mxu0
  %v254 = vadd.f32 %v187, %v253
  %255 = vmatmul.bf16.gmra.mxu0 %v163
  %v256 = vpop.f32.mrf.mxu0
  %v257 = vadd.f32 %v187, %v256
  %v258 = vpop.f32.mrf.mxu0
  %v259 = vadd.f32 %v187, %v258
  %260 = vmatmul.bf16.gmra.mxu0 %v164
  %v261 = vpop.f32.mrf.mxu0
  %v262 = vadd.f32 %v187, %v261
  %v263 = vpop.f32.mrf.mxu0
  %v264 = vadd.f32 %v187, %v263
  %265 = vmatmul.bf16.gmra.mxu0 %v165
  %v266 = vpop.f32.mrf.mxu0
  %v267 = vadd.f32 %v187, %v266
  %v268 = vpop.f32.mrf.mxu0
  %v269 = vadd.f32 %v187, %v268
  %270 = vmatmul.bf16.gmra.mxu0 %v166
  %v271 = vpop.f32.mrf.mxu0
  %v272 = vadd.f32 %v187, %v271
  %v273 = vpop.f32.mrf.mxu0
  %v274 = vadd.f32 %v187, %v273
  %275 = vmatmul.bf16.gmra.mxu0 %v167
  %v276 = vpop.f32.mrf.mxu0
  %v277 = vadd.f32 %v187, %v276
  %v278 = vpop.f32.mrf.mxu0
  %v279 = vadd.f32 %v187, %v278
  %280 = vmatmul.bf16.gmra.mxu0 %v168
  %v281 = vpop.f32.mrf.mxu0
  %v282 = vadd.f32 %v187, %v281
  %v283 = vpop.f32.mrf.mxu0
  %v284 = vadd.f32 %v187, %v283
  %285 = vdwg.mxu0
  %v286 = vmax.f32 %v247, 0.0
  %v287 = vmax.f32 %v249, 0.0
  %v288 = vmax.f32 %v252, 0.0
  %v289 = vmax.f32 %v254, 0.0
  %v290 = vmax.f32 %v257, 0.0
  %v291 = vmax.f32 %v259, 0.0
  %v292 = vmax.f32 %v262, 0.0
  %v293 = vmax.f32 %v264, 0.0
  %v294 = vmax.f32 %v267, 0.0
  %v295 = vmax.f32 %v269, 0.0
  %v296 = vmax.f32 %v272, 0.0
  %v297 = vmax.f32 %v274, 0.0
  %v298 = vmax.f32 %v277, 0.0
  %v299 = vmax.f32 %v279, 0.0
  %v300 = vmax.f32 %v282, 0.0
  %v301 = vmax.f32 %v284, 0.0
  %v302 = vpack.c.bf16 %v287, %v286
  %v303 = vpack.c.bf16 %v289, %v288
  %v304 = vpack.c.bf16 %v291, %v290
  %v305 = vpack.c.bf16 %v293, %v292
  %v306 = vpack.c.bf16 %v295, %v294
  %v307 = vpack.c.bf16 %v297, %v296
  %v308 = vpack.c.bf16 %v299, %v298
  %v309 = vpack.c.bf16 %v301, %v300
  %v310 = vld [vmem:[%s5] sm:$0xf]
  %v311 = vld [vmem:[%s5 + $0x4] sm:$0xf]
  %v312 = vld [vmem:[%s5 + $0x8] sm:$0xf]
  %v313 = vld [vmem:[%s5 + $0xc] sm:$0xf]
  %v314 = vld [vmem:[%s5 + $0x10] sm:$0xf]
  %v315 = vld [vmem:[%s5 + $0x14] sm:$0xf]
  %v316 = vld [vmem:[%s5 + $0x18] sm:$0xf]
  %v317 = vld [vmem:[%s5 + $0x1c] sm:$0xf]
  %v318 = vld [vmem:[%s6] sm:$0x1]
  %v320 = vperm.slane %v318, 0
  %v330 = vunpack.c.l.b16 %v310
  %v331 = vunpack.c.l.b16 %v311
  %v332 = vunpack.c.l.b16 %v312
  %v333 = vunpack.c.l.b16 %v313
  %v334 = vunpack.c.l.b16 %v314
  %v335 = vunpack.c.l.b16 %v315
  %v336 = vunpack.c.l.b16 %v316
  %v337 = vunpack.c.l.b16 %v317
  %v338 = vpack.c.b16 %v331, %v330
  %v339 = vpack.c.b16 %v333, %v332
  %v340 = vpack.c.b16 %v335, %v334
  %v341 = vpack.c.b16 %v337, %v336
  %vm346 = vcmask 523264
  %v348 = vsel %vm346, %v302, 0
  %v351 = vsel %vm346, %v303, 0
  %v354 = vsel %vm346, %v304, 0
  %v357 = vsel %vm346, %v305, 0
  %v360 = vsel %vm346, %v306, 0
  %v363 = vsel %vm346, %v307, 0
  %v366 = vsel %vm346, %v308, 0
  %v369 = vsel %vm346, %v309, 0
  %371 = vmatpush.bf16.msra.mxu0 0
  %372 = vmatpush.bf16.msra.mxu0 0
  %373 = vmatpush.bf16.msra.mxu0 0
  %374 = vmatpush.bf16.msra.mxu0 0
  %375 = vmatpush.bf16.msra.mxu0 %v341
  %376 = vmatpush.bf16.msra.mxu0 %v340
  %377 = vmatpush.bf16.msra.mxu0 %v339
  %378 = vmatpush.bf16.msra.mxu0 %v338
  %379 = vmatmul.bf16.gmra.mxu0 %v348
  %v380 = vpop.f32.mrf.mxu0
  %v381 = vadd.f32 %v320, %v380
  %v382 = vpop.f32.mrf.mxu0
  %v383 = vadd.f32 %v320, %v382
  %384 = vmatmul.bf16.gmra.mxu0 %v351
  %v385 = vpop.f32.mrf.mxu0
  %v386 = vadd.f32 %v320, %v385
  %v387 = vpop.f32.mrf.mxu0
  %v388 = vadd.f32 %v320, %v387
  %389 = vmatmul.bf16.gmra.mxu0 %v354
  %v390 = vpop.f32.mrf.mxu0
  %v391 = vadd.f32 %v320, %v390
  %v392 = vpop.f32.mrf.mxu0
  %v393 = vadd.f32 %v320, %v392
  %394 = vmatmul.bf16.gmra.mxu0 %v357
  %v395 = vpop.f32.mrf.mxu0
  %v396 = vadd.f32 %v320, %v395
  %v397 = vpop.f32.mrf.mxu0
  %v398 = vadd.f32 %v320, %v397
  %399 = vmatmul.bf16.gmra.mxu0 %v360
  %v400 = vpop.f32.mrf.mxu0
  %v401 = vadd.f32 %v320, %v400
  %v402 = vpop.f32.mrf.mxu0
  %v403 = vadd.f32 %v320, %v402
  %404 = vmatmul.bf16.gmra.mxu0 %v363
  %v405 = vpop.f32.mrf.mxu0
  %v406 = vadd.f32 %v320, %v405
  %v407 = vpop.f32.mrf.mxu0
  %v408 = vadd.f32 %v320, %v407
  %409 = vmatmul.bf16.gmra.mxu0 %v366
  %v410 = vpop.f32.mrf.mxu0
  %v411 = vadd.f32 %v320, %v410
  %v412 = vpop.f32.mrf.mxu0
  %v413 = vadd.f32 %v320, %v412
  %414 = vmatmul.bf16.gmra.mxu0 %v369
  %v415 = vpop.f32.mrf.mxu0
  %v416 = vadd.f32 %v320, %v415
  %v417 = vpop.f32.mrf.mxu0
  %v418 = vadd.f32 %v320, %v417
  %419 = vdwg.mxu0
  %vm420 = vcmask 23552
  %v421 = vsel %vm420, %v381, -inf
  %422 = vmax.xlane.f32.xlu0 %v421
  %v423 = vpop.xlane.xlu0 %422
  %v424 = vsel %vm420, %v383, -inf
  %425 = vmax.xlane.f32.xlu0 %v424
  %v426 = vpop.xlane.xlu0 %425
  %v427 = vsel %vm420, %v386, -inf
  %428 = vmax.xlane.f32.xlu0 %v427
  %v429 = vpop.xlane.xlu0 %428
  %v430 = vsel %vm420, %v388, -inf
  %431 = vmax.xlane.f32.xlu0 %v430
  %v432 = vpop.xlane.xlu0 %431
  %v433 = vsel %vm420, %v391, -inf
  %434 = vmax.xlane.f32.xlu0 %v433
  %v435 = vpop.xlane.xlu0 %434
  %v436 = vsel %vm420, %v393, -inf
  %437 = vmax.xlane.f32.xlu0 %v436
  %v438 = vpop.xlane.xlu0 %437
  %v439 = vsel %vm420, %v396, -inf
  %440 = vmax.xlane.f32.xlu0 %v439
  %v441 = vpop.xlane.xlu0 %440
  %v442 = vsel %vm420, %v398, -inf
  %443 = vmax.xlane.f32.xlu0 %v442
  %v444 = vpop.xlane.xlu0 %443
  %v445 = vsel %vm420, %v401, -inf
  %446 = vmax.xlane.f32.xlu0 %v445
  %v447 = vpop.xlane.xlu0 %446
  %v448 = vsel %vm420, %v403, -inf
  %449 = vmax.xlane.f32.xlu0 %v448
  %v450 = vpop.xlane.xlu0 %449
  %v451 = vsel %vm420, %v406, -inf
  %452 = vmax.xlane.f32.xlu0 %v451
  %v453 = vpop.xlane.xlu0 %452
  %v454 = vsel %vm420, %v408, -inf
  %455 = vmax.xlane.f32.xlu0 %v454
  %v456 = vpop.xlane.xlu0 %455
  %v457 = vsel %vm420, %v411, -inf
  %458 = vmax.xlane.f32.xlu0 %v457
  %v459 = vpop.xlane.xlu0 %458
  %v460 = vsel %vm420, %v413, -inf
  %461 = vmax.xlane.f32.xlu0 %v460
  %v462 = vpop.xlane.xlu0 %461
  %v463 = vsel %vm420, %v416, -inf
  %464 = vmax.xlane.f32.xlu0 %v463
  %v465 = vpop.xlane.xlu0 %464
  %v466 = vsel %vm420, %v418, -inf
  %467 = vmax.xlane.f32.xlu0 %v466
  %v468 = vpop.xlane.xlu0 %467
  %v469 = vsub.f32 %v381, %v423
  %v470 = vsub.f32 %v383, %v426
  %v471 = vsub.f32 %v386, %v429
  %v472 = vsub.f32 %v388, %v432
  %v473 = vsub.f32 %v391, %v435
  %v474 = vsub.f32 %v393, %v438
  %v475 = vsub.f32 %v396, %v441
  %v476 = vsub.f32 %v398, %v444
  %v477 = vsub.f32 %v401, %v447
  %v478 = vsub.f32 %v403, %v450
  %v479 = vsub.f32 %v406, %v453
  %v480 = vsub.f32 %v408, %v456
  %v481 = vsub.f32 %v411, %v459
  %v482 = vsub.f32 %v413, %v462
  %v483 = vsub.f32 %v416, %v465
  %v484 = vsub.f32 %v418, %v468
  %v485 = vmul.f32 %v469, 1.442695
  %v486 = vpow.pop %v485
  %v487 = vmul.f32 %v470, 1.442695
  %v488 = vpow.pop %v487
  %v489 = vmul.f32 %v471, 1.442695
  %v490 = vpow.pop %v489
  %v491 = vmul.f32 %v472, 1.442695
  %v492 = vpow.pop %v491
  %v493 = vmul.f32 %v473, 1.442695
  %v494 = vpow.pop %v493
  %v495 = vmul.f32 %v474, 1.442695
  %v496 = vpow.pop %v495
  %v497 = vmul.f32 %v475, 1.442695
  %v498 = vpow.pop %v497
  %v499 = vmul.f32 %v476, 1.442695
  %v500 = vpow.pop %v499
  %v501 = vmul.f32 %v477, 1.442695
  %v502 = vpow.pop %v501
  %v503 = vmul.f32 %v478, 1.442695
  %v504 = vpow.pop %v503
  %v505 = vmul.f32 %v479, 1.442695
  %v506 = vpow.pop %v505
  %v507 = vmul.f32 %v480, 1.442695
  %v508 = vpow.pop %v507
  %v509 = vmul.f32 %v481, 1.442695
  %v510 = vpow.pop %v509
  %v511 = vmul.f32 %v482, 1.442695
  %v512 = vpow.pop %v511
  %v513 = vmul.f32 %v483, 1.442695
  %v514 = vpow.pop %v513
  %v515 = vmul.f32 %v484, 1.442695
  %v516 = vpow.pop %v515
  %v517 = vsel %vm420, %v486, 0.0
  %518 = vadd.xlane.f32.xlu0 %v517
  %v519 = vpop.xlane.xlu0 %518
  %v520 = vsel %vm420, %v488, 0.0
  %521 = vadd.xlane.f32.xlu0 %v520
  %v522 = vpop.xlane.xlu0 %521
  %v523 = vsel %vm420, %v490, 0.0
  %524 = vadd.xlane.f32.xlu0 %v523
  %v525 = vpop.xlane.xlu0 %524
  %v526 = vsel %vm420, %v492, 0.0
  %527 = vadd.xlane.f32.xlu0 %v526
  %v528 = vpop.xlane.xlu0 %527
  %v529 = vsel %vm420, %v494, 0.0
  %530 = vadd.xlane.f32.xlu0 %v529
  %v531 = vpop.xlane.xlu0 %530
  %v532 = vsel %vm420, %v496, 0.0
  %533 = vadd.xlane.f32.xlu0 %v532
  %v534 = vpop.xlane.xlu0 %533
  %v535 = vsel %vm420, %v498, 0.0
  %536 = vadd.xlane.f32.xlu0 %v535
  %v537 = vpop.xlane.xlu0 %536
  %v538 = vsel %vm420, %v500, 0.0
  %539 = vadd.xlane.f32.xlu0 %v538
  %v540 = vpop.xlane.xlu0 %539
  %v541 = vsel %vm420, %v502, 0.0
  %542 = vadd.xlane.f32.xlu0 %v541
  %v543 = vpop.xlane.xlu0 %542
  %v544 = vsel %vm420, %v504, 0.0
  %545 = vadd.xlane.f32.xlu0 %v544
  %v546 = vpop.xlane.xlu0 %545
  %v547 = vsel %vm420, %v506, 0.0
  %548 = vadd.xlane.f32.xlu0 %v547
  %v549 = vpop.xlane.xlu0 %548
  %v550 = vsel %vm420, %v508, 0.0
  %551 = vadd.xlane.f32.xlu0 %v550
  %v552 = vpop.xlane.xlu0 %551
  %v553 = vsel %vm420, %v510, 0.0
  %554 = vadd.xlane.f32.xlu0 %v553
  %v555 = vpop.xlane.xlu0 %554
  %v556 = vsel %vm420, %v512, 0.0
  %557 = vadd.xlane.f32.xlu0 %v556
  %v558 = vpop.xlane.xlu0 %557
  %v559 = vsel %vm420, %v514, 0.0
  %560 = vadd.xlane.f32.xlu0 %v559
  %v561 = vpop.xlane.xlu0 %560
  %v562 = vsel %vm420, %v516, 0.0
  %563 = vadd.xlane.f32.xlu0 %v562
  %v564 = vpop.xlane.xlu0 %563
  %v565 = vrcp.pop %v519
  %v566 = vmul.f32 %v519, %v565
  %v567 = vsub.f32 1.0, %v566
  %v568 = vmul.f32 %v565, %v567
  %v569 = vadd.f32 %v565, %v568
  %vm570 = vweird.f32 %v519
  %vm571 = vweird.f32 %v565
  %vm572 = vmor %vm570, %vm571
  %v573 = vsel %vm572, %v565, %v569
  %v574 = vand.u32 2147483647, %v519
  %vm575 = vcmp.eq.f32.partialorder %v574, 8.507059e+37
  %v576 = vand.u32 %v519, 2147483648
  %v577 = vor.u32 1.1754944e-38, %v576
  %v578 = vsel %vm575, %v577, %v573
  %v579 = vmul.f32 %v486, %v578
  %v580 = vrcp.pop %v522
  %v581 = vmul.f32 %v522, %v580
  %v582 = vsub.f32 1.0, %v581
  %v583 = vmul.f32 %v580, %v582
  %v584 = vadd.f32 %v580, %v583
  %vm585 = vweird.f32 %v522
  %vm586 = vweird.f32 %v580
  %vm587 = vmor %vm585, %vm586
  %v588 = vsel %vm587, %v580, %v584
  %v589 = vand.u32 2147483647, %v522
  %vm590 = vcmp.eq.f32.partialorder %v589, 8.507059e+37
  %v591 = vand.u32 %v522, 2147483648
  %v592 = vor.u32 1.1754944e-38, %v591
  %v593 = vsel %vm590, %v592, %v588
  %v594 = vmul.f32 %v488, %v593
  %v595 = vrcp.pop %v525
  %v596 = vmul.f32 %v525, %v595
  %v597 = vsub.f32 1.0, %v596
  %v598 = vmul.f32 %v595, %v597
  %v599 = vadd.f32 %v595, %v598
  %vm600 = vweird.f32 %v525
  %vm601 = vweird.f32 %v595
  %vm602 = vmor %vm600, %vm601
  %v603 = vsel %vm602, %v595, %v599
  %v604 = vand.u32 2147483647, %v525
  %vm605 = vcmp.eq.f32.partialorder %v604, 8.507059e+37
  %v606 = vand.u32 %v525, 2147483648
  %v607 = vor.u32 1.1754944e-38, %v606
  %v608 = vsel %vm605, %v607, %v603
  %v609 = vmul.f32 %v490, %v608
  %v610 = vrcp.pop %v528
  %v611 = vmul.f32 %v528, %v610
  %v612 = vsub.f32 1.0, %v611
  %v613 = vmul.f32 %v610, %v612
  %v614 = vadd.f32 %v610, %v613
  %vm615 = vweird.f32 %v528
  %vm616 = vweird.f32 %v610
  %vm617 = vmor %vm615, %vm616
  %v618 = vsel %vm617, %v610, %v614
  %v619 = vand.u32 2147483647, %v528
  %vm620 = vcmp.eq.f32.partialorder %v619, 8.507059e+37
  %v621 = vand.u32 %v528, 2147483648
  %v622 = vor.u32 1.1754944e-38, %v621
  %v623 = vsel %vm620, %v622, %v618
  %v624 = vmul.f32 %v492, %v623
  %v625 = vrcp.pop %v531
  %v626 = vmul.f32 %v531, %v625
  %v627 = vsub.f32 1.0, %v626
  %v628 = vmul.f32 %v625, %v627
  %v629 = vadd.f32 %v625, %v628
  %vm630 = vweird.f32 %v531
  %vm631 = vweird.f32 %v625
  %vm632 = vmor %vm630, %vm631
  %v633 = vsel %vm632, %v625, %v629
  %v634 = vand.u32 2147483647, %v531
  %vm635 = vcmp.eq.f32.partialorder %v634, 8.507059e+37
  %v636 = vand.u32 %v531, 2147483648
  %v637 = vor.u32 1.1754944e-38, %v636
  %v638 = vsel %vm635, %v637, %v633
  %v639 = vmul.f32 %v494, %v638
  %v640 = vrcp.pop %v534
  %v641 = vmul.f32 %v534, %v640
  %v642 = vsub.f32 1.0, %v641
  %v643 = vmul.f32 %v640, %v642
  %v644 = vadd.f32 %v640, %v643
  %vm645 = vweird.f32 %v534
  %vm646 = vweird.f32 %v640
  %vm647 = vmor %vm645, %vm646
  %v648 = vsel %vm647, %v640, %v644
  %v649 = vand.u32 2147483647, %v534
  %vm650 = vcmp.eq.f32.partialorder %v649, 8.507059e+37
  %v651 = vand.u32 %v534, 2147483648
  %v652 = vor.u32 1.1754944e-38, %v651
  %v653 = vsel %vm650, %v652, %v648
  %v654 = vmul.f32 %v496, %v653
  %v655 = vrcp.pop %v537
  %v656 = vmul.f32 %v537, %v655
  %v657 = vsub.f32 1.0, %v656
  %v658 = vmul.f32 %v655, %v657
  %v659 = vadd.f32 %v655, %v658
  %vm660 = vweird.f32 %v537
  %vm661 = vweird.f32 %v655
  %vm662 = vmor %vm660, %vm661
  %v663 = vsel %vm662, %v655, %v659
  %v664 = vand.u32 2147483647, %v537
  %vm665 = vcmp.eq.f32.partialorder %v664, 8.507059e+37
  %v666 = vand.u32 %v537, 2147483648
  %v667 = vor.u32 1.1754944e-38, %v666
  %v668 = vsel %vm665, %v667, %v663
  %v669 = vmul.f32 %v498, %v668
  %v670 = vrcp.pop %v540
  %v671 = vmul.f32 %v540, %v670
  %v672 = vsub.f32 1.0, %v671
  %v673 = vmul.f32 %v670, %v672
  %v674 = vadd.f32 %v670, %v673
  %vm675 = vweird.f32 %v540
  %vm676 = vweird.f32 %v670
  %vm677 = vmor %vm675, %vm676
  %v678 = vsel %vm677, %v670, %v674
  %v679 = vand.u32 2147483647, %v540
  %vm680 = vcmp.eq.f32.partialorder %v679, 8.507059e+37
  %v681 = vand.u32 %v540, 2147483648
  %v682 = vor.u32 1.1754944e-38, %v681
  %v683 = vsel %vm680, %v682, %v678
  %v684 = vmul.f32 %v500, %v683
  %v685 = vrcp.pop %v543
  %v686 = vmul.f32 %v543, %v685
  %v687 = vsub.f32 1.0, %v686
  %v688 = vmul.f32 %v685, %v687
  %v689 = vadd.f32 %v685, %v688
  %vm690 = vweird.f32 %v543
  %vm691 = vweird.f32 %v685
  %vm692 = vmor %vm690, %vm691
  %v693 = vsel %vm692, %v685, %v689
  %v694 = vand.u32 2147483647, %v543
  %vm695 = vcmp.eq.f32.partialorder %v694, 8.507059e+37
  %v696 = vand.u32 %v543, 2147483648
  %v697 = vor.u32 1.1754944e-38, %v696
  %v698 = vsel %vm695, %v697, %v693
  %v699 = vmul.f32 %v502, %v698
  %v700 = vrcp.pop %v546
  %v701 = vmul.f32 %v546, %v700
  %v702 = vsub.f32 1.0, %v701
  %v703 = vmul.f32 %v700, %v702
  %v704 = vadd.f32 %v700, %v703
  %vm705 = vweird.f32 %v546
  %vm706 = vweird.f32 %v700
  %vm707 = vmor %vm705, %vm706
  %v708 = vsel %vm707, %v700, %v704
  %v709 = vand.u32 2147483647, %v546
  %vm710 = vcmp.eq.f32.partialorder %v709, 8.507059e+37
  %v711 = vand.u32 %v546, 2147483648
  %v712 = vor.u32 1.1754944e-38, %v711
  %v713 = vsel %vm710, %v712, %v708
  %v714 = vmul.f32 %v504, %v713
  %v715 = vrcp.pop %v549
  %v716 = vmul.f32 %v549, %v715
  %v717 = vsub.f32 1.0, %v716
  %v718 = vmul.f32 %v715, %v717
  %v719 = vadd.f32 %v715, %v718
  %vm720 = vweird.f32 %v549
  %vm721 = vweird.f32 %v715
  %vm722 = vmor %vm720, %vm721
  %v723 = vsel %vm722, %v715, %v719
  %v724 = vand.u32 2147483647, %v549
  %vm725 = vcmp.eq.f32.partialorder %v724, 8.507059e+37
  %v726 = vand.u32 %v549, 2147483648
  %v727 = vor.u32 1.1754944e-38, %v726
  %v728 = vsel %vm725, %v727, %v723
  %v729 = vmul.f32 %v506, %v728
  %v730 = vrcp.pop %v552
  %v731 = vmul.f32 %v552, %v730
  %v732 = vsub.f32 1.0, %v731
  %v733 = vmul.f32 %v730, %v732
  %v734 = vadd.f32 %v730, %v733
  %vm735 = vweird.f32 %v552
  %vm736 = vweird.f32 %v730
  %vm737 = vmor %vm735, %vm736
  %v738 = vsel %vm737, %v730, %v734
  %v739 = vand.u32 2147483647, %v552
  %vm740 = vcmp.eq.f32.partialorder %v739, 8.507059e+37
  %v741 = vand.u32 %v552, 2147483648
  %v742 = vor.u32 1.1754944e-38, %v741
  %v743 = vsel %vm740, %v742, %v738
  %v744 = vmul.f32 %v508, %v743
  %v745 = vrcp.pop %v555
  %v746 = vmul.f32 %v555, %v745
  %v747 = vsub.f32 1.0, %v746
  %v748 = vmul.f32 %v745, %v747
  %v749 = vadd.f32 %v745, %v748
  %vm750 = vweird.f32 %v555
  %vm751 = vweird.f32 %v745
  %vm752 = vmor %vm750, %vm751
  %v753 = vsel %vm752, %v745, %v749
  %v754 = vand.u32 2147483647, %v555
  %vm755 = vcmp.eq.f32.partialorder %v754, 8.507059e+37
  %v756 = vand.u32 %v555, 2147483648
  %v757 = vor.u32 1.1754944e-38, %v756
  %v758 = vsel %vm755, %v757, %v753
  %v759 = vmul.f32 %v510, %v758
  %v760 = vrcp.pop %v558
  %v761 = vmul.f32 %v558, %v760
  %v762 = vsub.f32 1.0, %v761
  %v763 = vmul.f32 %v760, %v762
  %v764 = vadd.f32 %v760, %v763
  %vm765 = vweird.f32 %v558
  %vm766 = vweird.f32 %v760
  %vm767 = vmor %vm765, %vm766
  %v768 = vsel %vm767, %v760, %v764
  %v769 = vand.u32 2147483647, %v558
  %vm770 = vcmp.eq.f32.partialorder %v769, 8.507059e+37
  %v771 = vand.u32 %v558, 2147483648
  %v772 = vor.u32 1.1754944e-38, %v771
  %v773 = vsel %vm770, %v772, %v768
  %v774 = vmul.f32 %v512, %v773
  %v775 = vrcp.pop %v561
  %v776 = vmul.f32 %v561, %v775
  %v777 = vsub.f32 1.0, %v776
  %v778 = vmul.f32 %v775, %v777
  %v779 = vadd.f32 %v775, %v778
  %vm780 = vweird.f32 %v561
  %vm781 = vweird.f32 %v775
  %vm782 = vmor %vm780, %vm781
  %v783 = vsel %vm782, %v775, %v779
  %v784 = vand.u32 2147483647, %v561
  %vm785 = vcmp.eq.f32.partialorder %v784, 8.507059e+37
  %v786 = vand.u32 %v561, 2147483648
  %v787 = vor.u32 1.1754944e-38, %v786
  %v788 = vsel %vm785, %v787, %v783
  %v789 = vmul.f32 %v514, %v788
  %v790 = vrcp.pop %v564
  %v791 = vmul.f32 %v564, %v790
  %v792 = vsub.f32 1.0, %v791
  %v793 = vmul.f32 %v790, %v792
  %v794 = vadd.f32 %v790, %v793
  %vm795 = vweird.f32 %v564
  %vm796 = vweird.f32 %v790
  %vm797 = vmor %vm795, %vm796
  %v798 = vsel %vm797, %v790, %v794
  %v799 = vand.u32 2147483647, %v564
  %vm800 = vcmp.eq.f32.partialorder %v799, 8.507059e+37
  %v801 = vand.u32 %v564, 2147483648
  %v802 = vor.u32 1.1754944e-38, %v801
  %v803 = vsel %vm800, %v802, %v798
  %v804 = vmul.f32 %v516, %v803
  %805 = vst.msk [vmem:[%s7] sm:$0xff] %vm420, %v579
  %806 = vst.msk [vmem:[%s7 + $0x8] sm:$0xff] %vm420, %v594
  %807 = vst.msk [vmem:[%s7 + $0x10] sm:$0xff] %vm420, %v609
  %808 = vst.msk [vmem:[%s7 + $0x18] sm:$0xff] %vm420, %v624
  %809 = vst.msk [vmem:[%s7 + $0x20] sm:$0xff] %vm420, %v639
  %810 = vst.msk [vmem:[%s7 + $0x28] sm:$0xff] %vm420, %v654
  %811 = vst.msk [vmem:[%s7 + $0x30] sm:$0xff] %vm420, %v669
  %812 = vst.msk [vmem:[%s7 + $0x38] sm:$0xff] %vm420, %v684
  %813 = vst.msk [vmem:[%s7 + $0x40] sm:$0xff] %vm420, %v699
  %814 = vst.msk [vmem:[%s7 + $0x48] sm:$0xff] %vm420, %v714
  %815 = vst.msk [vmem:[%s7 + $0x50] sm:$0xff] %vm420, %v729
  %816 = vst.msk [vmem:[%s7 + $0x58] sm:$0xff] %vm420, %v744
  %817 = vst.msk [vmem:[%s7 + $0x60] sm:$0xff] %vm420, %v759
  %818 = vst.msk [vmem:[%s7 + $0x68] sm:$0xff] %vm420, %v774
  %819 = vst.msk [vmem:[%s7 + $0x70] sm:$0xff] %vm420, %v789
  %820 = vst.msk [vmem:[%s7 + $0x78] sm:$0xff] %vm420, %v804
  // Predicated region
  $region30: #{strategy_network_forward.1} parent=0 // pred_check
    _
  $region31: #{strategy_network_forward.1} parent=0 // pred_check_branch
    %822 = sbr.rel (0) target = $region33
  $region32: #{strategy_network_forward.1} parent=0 // pred_region
    _
  $region33: #{strategy_network_forward.1} parent=0 // pred_fallthru
    _
  // Predicated region
  $region34: #{strategy_network_forward.1} parent=0 // pred_check
    _
  $region35: #{strategy_network_forward.1} parent=0 // pred_check_branch
    %824 = sbr.rel (0) target = $region37
  $region36: #{strategy_network_forward.1} parent=0 // pred_region
    _
  $region37: #{strategy_network_forward.1} parent=0 // pred_fallthru
    _

</llo_original>
